<compile_context>
chip_gen: v6e
topology: v6e:2x2x1
jax: 0.10.0
libtpu: 0.0.40
codegen_flags: <defaults>
</compile_context>

<pallas_src>
import jax
import jax.numpy as jnp
from jax.experimental import pallas as pl
from jax.experimental.pallas import tpu as pltpu


# ---------------------------------------------------------------------------
# helpers
# ---------------------------------------------------------------------------
def _round_up(n, m):
    return ((n + m - 1) // m) * m


def _pad2d(a, rows, cols):
    pr, pc = rows - a.shape[0], cols - a.shape[1]
    if pr == 0 and pc == 0:
        return a
    return jnp.pad(a, ((0, pr), (0, pc)))


def _leaky_relu(x, slope=0.1):
    return jnp.where(x > 0, x, slope * x)


def _pick_tiling(bs, tm_max):
    """Pick (tm, padded batch, grid steps).

    tm is a multiple of 8, capped at tm_max (default 512 to amortize the
    ~0.35us per-grid-step pipeline overhead).  For bs > 8 the tile is capped
    at half the batch so grid >= 2 and both v7x TensorCores get work.
    """
    bs8 = _round_up(bs, 8)
    if bs8 <= 8:
        tm = bs8
    else:
        tm = min(tm_max, max(8, (bs8 // 2) // 8 * 8))
    bs_p = _round_up(bs8, tm)
    return tm, bs_p, bs_p // tm


# ---------------------------------------------------------------------------
# mode == 'linear'
# ---------------------------------------------------------------------------
def make_linear_forward(params, *, tm_max=512, compute_dtype=jnp.bfloat16):
    """Build a jitted forward: x(bs, input_dim) -> (lat, out)."""
    input_dim, hidden_dim = params["w1"].shape
    latent_dim = params["w2"].shape[1]
    clus_num = params["wc"].shape[1]

    hid_p = _round_up(hidden_dim, 128)
    lat_p = _round_up(latent_dim, 128)
    cls_p = _round_up(clus_num, 128)

    # Pack the logits into the spare lanes of the latent block when they fit.
    out_off = _round_up(latent_dim, 8)
    if latent_dim <= 128 and out_off + clus_num <= 128:
        slab_w = 128                       # lat at lanes [0,latent), out at [out_off, out_off+clus)
    else:
        out_off = lat_p                    # fallback: side-by-side blocks
        slab_w = lat_p + cls_p

    # --- hoisted weight prep (runs once at build time) ---------------------
    w1p = _pad2d(params["w1"], input_dim, hid_p).astype(compute_dtype)   # (in, hid_p)
    b1p = _pad2d(params["b1"], 1, hid_p).astype(jnp.float32)             # (1, hid_p)

    # Fused second layer + classifier: one matmul off h produces both lat and
    # the logits, with the logit columns pre-shifted to their packed lanes.
    w2c = params["w2"] @ params["wc"]                   # (hidden, clus) f32
    b2c = params["b2"] @ params["wc"] + params["bc"]    # (1, clus) f32
    wf = jnp.zeros((hid_p, slab_w), jnp.float32)
    wf = wf.at[:hidden_dim, :latent_dim].set(params["w2"])
    wf = wf.at[:hidden_dim, out_off:out_off + clus_num].set(w2c)
    wf = wf.astype(compute_dtype)                                        # (hid_p, slab_w)
    bf = jnp.zeros((1, slab_w), jnp.float32)
    bf = bf.at[:, :latent_dim].set(params["b2"])
    bf = bf.at[:, out_off:out_off + clus_num].set(b2c)                   # (1, slab_w)

    def kernel(x_ref, w1_ref, b1_ref, wf_ref, bf_ref, slab_ref):
        x = x_ref[...].astype(compute_dtype)            # x DMA'd as f32, cast in-kernel
        h = jnp.dot(x, w1_ref[...], preferred_element_type=jnp.float32)
        h = _leaky_relu(h + b1_ref[...])
        # TODO(synk): Dropout(0.2) is identity in eval mode; training-mode mask omitted.
        # Single fused matmul -> lat in lanes [0,latent), logits in lanes
        # [out_off, out_off+clus); one unmasked 128-lane-multiple store.
        slab_ref[...] = (jnp.dot(h.astype(compute_dtype), wf_ref[...],
                                 preferred_element_type=jnp.float32)
                         + bf_ref[...])

    def fwd(x):
        bs = x.shape[0]
        tm, bs_p, steps = _pick_tiling(bs, tm_max)
        xin = x if bs_p == bs else jnp.pad(x, ((0, bs_p - bs), (0, 0)))
        resident = lambda i: (0, 0)        # weights stay resident across grid steps

        slab = pl.pallas_call(
            kernel,
            grid=(steps,),
            in_specs=[
                pl.BlockSpec((tm, input_dim), lambda i: (i, 0)),
                pl.BlockSpec(w1p.shape, resident),
                pl.BlockSpec(b1p.shape, resident),
                pl.BlockSpec(wf.shape, resident),
                pl.BlockSpec(bf.shape, resident),
            ],
            out_specs=pl.BlockSpec((tm, slab_w), lambda i: (i, 0)),
            out_shape=jax.ShapeDtypeStruct((bs_p, slab_w), jnp.float32),
            compiler_params=pltpu.CompilerParams(
                dimension_semantics=("parallel",)),
        )(xin, w1p, b1p, wf, bf)

        lat = slab[:bs, :latent_dim]
        out = slab[:bs, out_off:out_off + clus_num]
        return lat, out

    return jax.jit(fwd)


# ---------------------------------------------------------------------------
# mode == 'conv'
# ---------------------------------------------------------------------------
def make_conv_forward(params, *, length, conv_ker, stride, tm_max=512,
                      compute_dtype=jnp.bfloat16):
    """Build a jitted forward: x(bs, length) -> (lat, out) for conv mode."""
    K = conv_ker
    l_out = (length - K) // stride + 1
    clus_num = params["wc"].shape[1]

    lat_p = _round_up(l_out, 128)
    cls_p = _round_up(clus_num, 128)

    out_off = _round_up(l_out, 8)
    if l_out <= 128 and out_off + clus_num <= 128:
        slab_w = 128
    else:
        out_off = lat_p
        slab_w = lat_p + cls_p

    # Fast path: one 128-lane vreg per row, per-tap XLU lane rotations.
    single_vreg = (stride == 1) and (length <= 128) and (l_out + K - 1 <= 128)
    if single_vreg:
        len_p = 128
    else:
        len_p = _round_up(max(length, (lat_p - 1) * stride + K), 128)

    # Classifier weights with logit columns pre-shifted to their packed lanes.
    wcs = jnp.zeros((lat_p, slab_w), jnp.float32)
    wcs = wcs.at[:l_out, out_off:out_off + clus_num].set(params["wc"])
    wcs = wcs.astype(compute_dtype)                                      # (lat_p, slab_w)
    bcs = jnp.zeros((1, slab_w), jnp.float32)
    bcs = bcs.at[:, out_off:out_off + clus_num].set(params["bc"])        # (1, slab_w)

    # K conv taps + conv bias coalesced into one small SMEM scalar vector.
    conv_wb = jnp.concatenate(
        [params["wconv"].reshape(-1), params["bconv"].reshape(-1)]
    ).astype(jnp.float32)                                                # (K+1,)

    def kernel(x_ref, cwb_ref, wc_ref, bc_ref, slab_ref):
        # K-tap shift-add conv on the VPU, all in f32 (no bf16 round trip).
        if single_vreg:
            x = x_ref[...]                                  # (tm, 128) f32, one vreg/row
            acc = cwb_ref[0] * x
            for k in range(1, K):
                # Lane-rotate left by k (XLU slot, positive shift = len_p - k).
                # Wrapped lanes land at >= len_p - k >= l_out and are masked below.
                acc = acc + cwb_ref[k] * pltpu.roll(x, len_p - k, axis=1)
        else:
            # Ref-level (possibly strided) lane loads; len_p padded so every tap
            # window is full width.
            def tap(k):
                if stride == 1:
                    return x_ref[:, pl.ds(k, lat_p)]
                return x_ref[:, pl.ds(k, lat_p, stride=stride)]
            acc = cwb_ref[0] * tap(0)
            for k in range(1, K):
                acc = acc + cwb_ref[k] * tap(k)

        conv = acc + cwb_ref[K]                             # + conv bias
        lat = _leaky_relu(conv)
        # Zero lanes beyond the true conv length (kills padding / wrap lanes).
        lane = jax.lax.broadcasted_iota(jnp.int32, lat.shape, 1)
        lat = jnp.where(lane < l_out, lat, 0.0)

        out_sh = (jnp.dot(lat.astype(compute_dtype), wc_ref[...],
                          preferred_element_type=jnp.float32)
                  + bc_ref[...])                            # logits already at packed lanes

        if slab_w == lat_p:                                 # packed: single 128-lane store
            slab_ref[...] = lat + out_sh
        else:                                               # fallback: side-by-side blocks
            slab_ref[:, :lat_p] = lat + out_sh[:, :lat_p]
            slab_ref[:, lat_p:] = out_sh[:, lat_p:]

    def fwd(x):
        bs = x.shape[0]
        tm, bs_p, steps = _pick_tiling(bs, tm_max)
        pr, pc = bs_p - bs, len_p - length
        xin = x if (pr == 0 and pc == 0) else jnp.pad(x, ((0, pr), (0, pc)))
        resident = lambda i: (0, 0)

        slab = pl.pallas_call(
            kernel,
            grid=(steps,),
            in_specs=[
                pl.BlockSpec((tm, len_p), lambda i: (i, 0)),
                pl.BlockSpec(memory_space=pltpu.MemorySpace.SMEM),  # conv taps + bias
                pl.BlockSpec(wcs.shape, resident),
                pl.BlockSpec(bcs.shape, resident),
            ],
            out_specs=pl.BlockSpec((tm, slab_w), lambda i: (i, 0)),
            out_shape=jax.ShapeDtypeStruct((bs_p, slab_w), jnp.float32),
            compiler_params=pltpu.CompilerParams(
                dimension_semantics=("parallel",)),
        )(xin, conv_wb, wcs, bcs)

        lat = slab[:bs, :l_out]
        out = slab[:bs, out_off:out_off + clus_num]
        return lat, out

    return jax.jit(fwd)


# ---------------------------------------------------------------------------
# Pure-JAX references (f32) for correctness sanity check
# ---------------------------------------------------------------------------
def _ref_linear(x, p):
    h = _leaky_relu(x @ p["w1"] + p["b1"])
    lat = h @ p["w2"] + p["b2"]
    out = lat @ p["wc"] + p["bc"]
    return lat, out


def _ref_conv(x, p, K, stride):
    bs, L = x.shape
    l_out = (L - K) // stride + 1
    cols = [jnp.sum(x[:, j * stride: j * stride + K] * p["wconv"][None, :], axis=1)
            + p["bconv"][0, 0] for j in range(l_out)]
    conv = jnp.stack(cols, axis=1)
    lat = _leaky_relu(conv)
    out = lat @ p["wc"] + p["bc"]
    return lat, out


# ---------------------------------------------------------------------------
# Main
# ---------------------------------------------------------------------------
if __name__ == "__main__":
    # DeepClusterNet args: input_dim=32, hidden_dim=32, conv_ker=5, stride=1
    #   -> latent_dim = (32 - 5)//1 + 1 = 28, clus_num = 4, batch = 8
    batch, input_dim, hidden_dim = 8, 32, 32
    conv_ker, stride = 5, 1
    latent_dim = (input_dim - conv_ker) // stride + 1   # 28
    clus_num = 4

    key = jax.random.PRNGKey(0)
    ks = jax.random.split(key, 8)
    scale = 0.1
    params = {
        # mlp: Linear(input, hidden) -> LeakyReLU(0.1) -> Dropout -> Linear(hidden, latent)
        "w1": scale * jax.random.normal(ks[0], (input_dim, hidden_dim), jnp.float32),
        "b1": scale * jax.random.normal(ks[1], (1, hidden_dim), jnp.float32),
        "w2": scale * jax.random.normal(ks[2], (hidden_dim, latent_dim), jnp.float32),
        "b2": scale * jax.random.normal(ks[3], (1, latent_dim), jnp.float32),
        # cls: Linear(latent, clus_num)
        "wc": scale * jax.random.normal(ks[4], (latent_dim, clus_num), jnp.float32),
        "bc": scale * jax.random.normal(ks[5], (1, clus_num), jnp.float32),
        # conv1d(1 -> 1, kernel_size=conv_ker, stride=stride)
        "wconv": scale * jax.random.normal(ks[6], (conv_ker,), jnp.float32),
        "bconv": scale * jax.random.normal(ks[7], (1, 1), jnp.float32),
    }
    x = jax.random.normal(jax.random.PRNGKey(1), (batch, input_dim), jnp.float32)

    linear_fwd = make_linear_forward(params)
    conv_fwd = make_conv_forward(params, length=input_dim,
                                 conv_ker=conv_ker, stride=stride)

    # --- mode == 'linear' ---
    lat_l, out_l = linear_fwd(x)
    jax.block_until_ready((lat_l, out_l))
    ref_lat_l, ref_out_l = _ref_linear(x, params)
    assert lat_l.shape == ref_lat_l.shape and out_l.shape == ref_out_l.shape
    # bf16 MXU operands with f32 accumulation (+ fused w2@wc) -> loosened tolerance.
    assert jnp.allclose(lat_l, ref_lat_l, atol=2e-2, rtol=2e-2), "linear-mode lat mismatch"
    assert jnp.allclose(out_l, ref_out_l, atol=2e-2, rtol=2e-2), "linear-mode out mismatch"

    # --- mode == 'conv' ---
    lat_c, out_c = conv_fwd(x)
    jax.block_until_ready((lat_c, out_c))
    ref_lat_c, ref_out_c = _ref_conv(x, params, conv_ker, stride)
    assert lat_c.shape == ref_lat_c.shape and out_c.shape == ref_out_c.shape
    assert jnp.allclose(lat_c, ref_lat_c, atol=2e-2, rtol=2e-2), "conv-mode lat mismatch"
    assert jnp.allclose(out_c, ref_out_c, atol=2e-2, rtol=2e-2), "conv-mode out mismatch"

    print("KERNEL_OK")
</pallas_src>

<mosaic_0001>
module attributes {stable_mosaic.version = 11 : i64} {
  func.func @kernel(%arg0: i32, %arg1: memref<8x32xf32, #tpu.memory_space<vmem>>, %arg2: memref<32x128xbf16, #tpu.memory_space<vmem>>, %arg3: memref<1x128xf32, #tpu.memory_space<vmem>>, %arg4: memref<128x128xbf16, #tpu.memory_space<vmem>>, %arg5: memref<1x128xf32, #tpu.memory_space<vmem>>, %arg6: memref<8x128xf32, #tpu.memory_space<vmem>>) attributes {dimension_semantics = [#tpu.dimension_semantics<parallel>], iteration_bounds = array<i64: 1>, scalar_prefetch = 0 : i64, scratch_operands = 0 : i64, tpu.core_type = #tpu.core_type<tc>, window_params = [{transform_indices = @transform_0, window_bounds = array<i64: 8, 32>}, {pipeline_mode = #tpu.pipeline_mode<synchronous>, transform_indices = @transform_1, window_bounds = array<i64: 32, 128>}, {pipeline_mode = #tpu.pipeline_mode<synchronous>, transform_indices = @transform_2, window_bounds = array<i64: 1, 128>}, {pipeline_mode = #tpu.pipeline_mode<synchronous>, transform_indices = @transform_3, window_bounds = array<i64: 128, 128>}, {pipeline_mode = #tpu.pipeline_mode<synchronous>, transform_indices = @transform_4, window_bounds = array<i64: 1, 128>}, {transform_indices = @transform_5, window_bounds = array<i64: 8, 128>}]} {
    %c0 = arith.constant 0 : index
    %c0_0 = arith.constant 0 : index
    %0 = vector.load %arg1[%c0, %c0_0] : memref<8x32xf32, #tpu.memory_space<vmem>>, vector<8x32xf32>
    %1 = arith.truncf %0 : vector<8x32xf32> to vector<8x32xbf16>
    %c0_1 = arith.constant 0 : index
    %c0_2 = arith.constant 0 : index
    %2 = vector.load %arg2[%c0_1, %c0_2] : memref<32x128xbf16, #tpu.memory_space<vmem>>, vector<32x128xbf16>
    %cst = arith.constant dense<0.000000e+00> : vector<8x128xf32>
    %3 = tpu.matmul %1, %2, %cst {dimension_numbers = #tpu.dot_dimension_numbers<[1], [0], [0], [1], [0, 0, 1, 1], [], []>} : vector<8x32xbf16>, vector<32x128xbf16>, vector<8x128xf32> -> vector<8x128xf32>
    %c0_3 = arith.constant 0 : index
    %c0_4 = arith.constant 0 : index
    %4 = vector.load %arg3[%c0_3, %c0_4] : memref<1x128xf32, #tpu.memory_space<vmem>>, vector<1x128xf32>
    %5 = vector.broadcast %4 : vector<1x128xf32> to vector<8x128xf32>
    %6 = arith.addf %3, %5 : vector<8x128xf32>
    %cst_5 = arith.constant 0.000000e+00 : f32
    %7 = vector.broadcast %cst_5 : f32 to vector<8x128xf32>
    %8 = arith.cmpf ogt, %6, %7 : vector<8x128xf32>
    %cst_6 = arith.constant 1.000000e-01 : f32
    %9 = vector.broadcast %cst_6 : f32 to vector<8x128xf32>
    %10 = arith.mulf %9, %6 : vector<8x128xf32>
    %11 = arith.select %8, %6, %10 : vector<8x128xi1>, vector<8x128xf32>
    %12 = arith.truncf %11 : vector<8x128xf32> to vector<8x128xbf16>
    %c0_7 = arith.constant 0 : index
    %c0_8 = arith.constant 0 : index
    %13 = vector.load %arg4[%c0_7, %c0_8] : memref<128x128xbf16, #tpu.memory_space<vmem>>, vector<128x128xbf16>
    %cst_9 = arith.constant dense<0.000000e+00> : vector<8x128xf32>
    %14 = tpu.matmul %12, %13, %cst_9 {dimension_numbers = #tpu.dot_dimension_numbers<[1], [0], [0], [1], [0, 0, 1, 1], [], []>} : vector<8x128xbf16>, vector<128x128xbf16>, vector<8x128xf32> -> vector<8x128xf32>
    %c0_10 = arith.constant 0 : index
    %c0_11 = arith.constant 0 : index
    %15 = vector.load %arg5[%c0_10, %c0_11] : memref<1x128xf32, #tpu.memory_space<vmem>>, vector<1x128xf32>
    %16 = vector.broadcast %15 : vector<1x128xf32> to vector<8x128xf32>
    %17 = arith.addf %14, %16 : vector<8x128xf32>
    %c0_12 = arith.constant 0 : index
    %c0_13 = arith.constant 0 : index
    %18 = vector.load %arg6[%c0_12, %c0_13] : memref<8x128xf32, #tpu.memory_space<vmem>>, vector<8x128xf32>
    tpu.vector_store %arg6[%c0_12, %c0_13], %17 {strides = array<i32>} : memref<8x128xf32, #tpu.memory_space<vmem>>, vector<8x128xf32>,
    return
  }
  func.func @transform_0(%arg0: i32) -> (i32, i32) {
    %c0_i32 = arith.constant 0 : i32
    %c0_i32_0 = arith.constant 0 : i32
    return %arg0, %c0_i32 : i32, i32
  }
  func.func @transform_1(%arg0: i32) -> (i32, i32) {
    %c0_i32 = arith.constant 0 : i32
    %c0_i32_0 = arith.constant 0 : i32
    %c0_i32_1 = arith.constant 0 : i32
    return %c0_i32, %c0_i32_0 : i32, i32
  }
  func.func @transform_2(%arg0: i32) -> (i32, i32) {
    %c0_i32 = arith.constant 0 : i32
    %c0_i32_0 = arith.constant 0 : i32
    %c0_i32_1 = arith.constant 0 : i32
    return %c0_i32, %c0_i32_0 : i32, i32
  }
  func.func @transform_3(%arg0: i32) -> (i32, i32) {
    %c0_i32 = arith.constant 0 : i32
    %c0_i32_0 = arith.constant 0 : i32
    %c0_i32_1 = arith.constant 0 : i32
    return %c0_i32, %c0_i32_0 : i32, i32
  }
  func.func @transform_4(%arg0: i32) -> (i32, i32) {
    %c0_i32 = arith.constant 0 : i32
    %c0_i32_0 = arith.constant 0 : i32
    %c0_i32_1 = arith.constant 0 : i32
    return %c0_i32, %c0_i32_0 : i32, i32
  }
  func.func @transform_5(%arg0: i32) -> (i32, i32) {
    %c0_i32 = arith.constant 0 : i32
    %c0_i32_0 = arith.constant 0 : i32
    return %arg0, %c0_i32 : i32, i32
  }
}

</mosaic_0001>

<llo_original>
// kernel: fwd.1
$region0: #{fwd.1}
  #allocation0 [shape = 'u32[]', space=smem, size = 0x4, offset = 0x4, fixed_abs, tag = 'smem constant byte address 0x4 - core index']
  #allocation1 [shape = 'u32[144,128]{1,0:T(1,128)}', space=vmem, size = 0x12000, scoped, tag = 'internal scratch']
  %s0 = inlined_call_operand.hbm [shape: f32[8,32], index: 0, kind: input, shape index: {}]
  %s1 = inlined_call_operand.hbm [shape: bf16[32,128], index: 1, kind: input, shape index: {}]
  %s2 = inlined_call_operand.vmem [shape: f32[1,128], index: 2, kind: input, shape index: {}]
  %s3 = inlined_call_operand.hbm [shape: bf16[128,128], index: 3, kind: input, shape index: {}]
  %s4 = inlined_call_operand.vmem [shape: f32[1,128], index: 4, kind: input, shape index: {}]
  %s5 = inlined_call_operand.vmem [shape: f32[8,128], index: 5, kind: output, shape index: {}]
  %s6 = sld [smem:[#allocation0]]
  $region42: #{fwd.1} parent=0
    _
  %s8 = ssub.s32 1, %s6
  %s9 = scalar_select 0, %s8, %s6
  $region1: #{fwd.1} parent=0
    #allocation2 [shape = 'u8[4096]{0}', space=vmem, size = 0x1000, scoped, tag = 'input window, operand 0, single buffered']
    #allocation3 [shape = 's32[1]{0}', space=sflag, size = 0x4, scoped, tag = 'scoped memory for fwd.1']
    #allocation4 [shape = 'u8[8192]{0}', space=vmem, size = 0x2000, scoped, tag = 'input window, operand 1, single buffered']
    #allocation5 [shape = 's32[1]{0}', space=sflag, size = 0x4, scoped, tag = 'scoped memory for fwd.1']
    #allocation6 [shape = 'u8[32768]{0}', space=vmem, size = 0x8000, scoped, tag = 'input window, operand 3, single buffered']
    %10 = vsyncpa [#allocation3], 0
    %11 = vsyncpa [#allocation5], 0
    // Predicated region
    $region2: #{fwd.1} parent=1 // pred_check
      _
    $region3: #{fwd.1} parent=1 // pred_check_branch
      %13 = sbr.rel (0) target = $region5
    $region4: #{fwd.1} parent=1 // pred_region
      %s15 = ssub.s32 128, 128
      %16 = vsyncadd [#allocation3], %s15
      %s18 = sshll.u32 [#allocation2], 4
      %s19 = int_to_ptr.vmem [resolvable:$true] %s18
      %21 = dma.hbm_to_vmem [thread:$0]  %s0, 128, %s19, [#allocation3]
    $region5: #{fwd.1} parent=1 // pred_fallthru
      _
    // Predicated region
    $region6: #{fwd.1} parent=1 // pred_check
      _
    $region7: #{fwd.1} parent=1 // pred_check_branch
      %23 = sbr.rel (0) target = $region9
    $region8: #{fwd.1} parent=1 // pred_region
      %s25 = ssub.s32 256, 256
      %26 = vsyncadd [#allocation5], %s25
      %s27 = sshll.u32 [#allocation4], 4
      %s28 = int_to_ptr.vmem [resolvable:$true] %s27
      %33 = dma.hbm_to_vmem [thread:$0]  %s1, 256, %s28, [#allocation5], 64, 64, 4
    $region9: #{fwd.1} parent=1 // pred_fallthru
      _
    // Predicated region
    $region10: #{fwd.1} parent=1 // pred_check
      _
    $region11: #{fwd.1} parent=1 // pred_check_branch
      %35 = sbr.rel (0) target = $region13
    $region12: #{fwd.1} parent=1 // pred_region
      _
    $region13: #{fwd.1} parent=1 // pred_fallthru
      _
    // Predicated region
    $region14: #{fwd.1} parent=1 // pred_check
      _
    $region15: #{fwd.1} parent=1 // pred_check_branch
      %37 = sbr.rel (0) target = $region17
    $region16: #{fwd.1} parent=1 // pred_region
      %s39 = ssub.s32 1024, 1024
      %40 = vsyncadd [#allocation5], %s39
      %s41 = sshll.u32 [#allocation6], 4
      %s42 = int_to_ptr.vmem [resolvable:$true] %s41
      %47 = dma.hbm_to_vmem [thread:$0]  %s3, 1024, %s42, [#allocation5], 64, 64, 4
    $region17: #{fwd.1} parent=1 // pred_fallthru
      _
    // Predicated region
    $region18: #{fwd.1} parent=1 // pred_check
      _
    $region19: #{fwd.1} parent=1 // pred_check_branch
      %49 = sbr.rel (0) target = $region21
    $region20: #{fwd.1} parent=1 // pred_region
      _
    $region21: #{fwd.1} parent=1 // pred_fallthru
      _
    // Predicated region
    $region22: #{fwd.1} parent=1 // pred_check
      _
    $region23: #{fwd.1} parent=1 // pred_check_branch
      %51 = sbr.rel (0) target = $region25
    $region24: #{fwd.1} parent=1 // pred_region
      %52 = dma.done [#allocation3], 128
    $region25: #{fwd.1} parent=1 // pred_fallthru
      _
    // Predicated region
    $region26: #{fwd.1} parent=1 // pred_check
      _
    $region27: #{fwd.1} parent=1 // pred_check_branch
      %54 = sbr.rel (0) target = $region29
    $region28: #{fwd.1} parent=1 // pred_region
      %55 = dma.done [#allocation5], 256
    $region29: #{fwd.1} parent=1 // pred_fallthru
      _
    // Predicated region
    $region30: #{fwd.1} parent=1 // pred_check
      _
    $region31: #{fwd.1} parent=1 // pred_check_branch
      %57 = sbr.rel (0) target = $region33
    $region32: #{fwd.1} parent=1 // pred_region
      %58 = dma.done [#allocation5], 1024
    $region33: #{fwd.1} parent=1 // pred_fallthru
      _
    %v60 = vld [vmem:[#allocation2] sm:$0xff]
    %v61 = vpack.c.bf16 %v60, %v60
    %v62 = vld [vmem:[#allocation4] sm:$0xf]
    %v63 = vld [vmem:[#allocation4 + $0x4] sm:$0xf]
    %v64 = vld [vmem:[#allocation4 + $0x8] sm:$0xf]
    %v65 = vld [vmem:[#allocation4 + $0xc] sm:$0xf]
    %v66 = vld [vmem:[%s2] sm:$0x1]
    %v68 = vlaneseq
    %v69 = vshrl.u32 %v68, 7
    %v70 = vsub.s32 0, %v69
    %v71 = vrot.slane %v66, %v70
    %v77 = vunpack.c.l.b16 %v62
    %v78 = vunpack.c.l.b16 %v63
    %v79 = vunpack.c.l.b16 %v64
    %v80 = vunpack.c.l.b16 %v65
    %v81 = vpack.c.b16 %v78, %v77
    %v82 = vpack.c.b16 %v80, %v79
    %vm85 = vcmask 261120
    %v87 = vsel %vm85, %v61, 0
    %89 = vmatprep.subr.bf16.mxu0 0
    %90 = vmatpush1.bf16.msra.mxu0 0
    %91 = vmatprep.subr.bf16.mxu0 0
    %92 = vmatpush1.bf16.msra.mxu0 0
    %93 = vmatprep.subr.bf16.mxu0 0
    %94 = vmatpush1.bf16.msra.mxu0 0
    %95 = vmatprep.subr.bf16.mxu0 0
    %96 = vmatpush1.bf16.msra.mxu0 0
    %97 = vmatprep.subr.bf16.mxu0 0
    %98 = vmatpush1.bf16.msra.mxu0 0
    %99 = vmatprep.subr.bf16.mxu0 0
    %100 = vmatpush1.bf16.msra.mxu0 0
    %101 = vmatprep.subr.bf16.mxu0 0
    %102 = vmatpush1.bf16.msra.mxu0 %v82
    %103 = vmatprep.subr.bf16.mxu0 0
    %104 = vmatpush1.bf16.msra.mxu0 %v81
    %105 = vmatprep.subr.bf16.mxu0 0
    %106 = vmatpush2.bf16.msra.mxu0 0
    %107 = vmatprep.subr.bf16.mxu0 0
    %108 = vmatpush2.bf16.msra.mxu0 0
    %109 = vmatprep.subr.bf16.mxu0 0
    %110 = vmatpush2.bf16.msra.mxu0 0
    %111 = vmatprep.subr.bf16.mxu0 0
    %112 = vmatpush2.bf16.msra.mxu0 0
    %113 = vmatprep.subr.bf16.mxu0 0
    %114 = vmatpush2.bf16.msra.mxu0 0
    %115 = vmatprep.subr.bf16.mxu0 0
    %116 = vmatpush2.bf16.msra.mxu0 0
    %117 = vmatprep.subr.bf16.mxu0 0
    %118 = vmatpush2.bf16.msra.mxu0 0
    %119 = vmatprep.subr.bf16.mxu0 0
    %120 = vmatpush2.bf16.msra.mxu0 0
    %121 = vmatprep.mubr.bf16.mxu0 0
    %122 = vmatmul.mubr.bf16.gmra.mxu0 %v87
    %v123 = vpop.f32.mrf.mxu0
    %v124 = vadd.f32 %v71, %v123
    %v125 = vpop.f32.mrf.mxu0
    %v126 = vpop.f32.mrf.mxu0
    %v127 = vpop.f32.mrf.mxu0
    %128 = vdwg.mxu0
    %vm129 = vcmp.gt.f32.partialorder %v124, 0.0
    %v130 = vmul.f32 %v124, 0.1
    %v131 = vsel %vm129, %v124, %v130
    %v132 = vpack.c.bf16 %v131, %v131
    %v133 = vld [vmem:[#allocation6] sm:$0xf]
    %v134 = vld [vmem:[#allocation6 + $0x4] sm:$0xf]
    %v135 = vld [vmem:[#allocation6 + $0x8] sm:$0xf]
    %v136 = vld [vmem:[#allocation6 + $0xc] sm:$0xf]
    %v137 = vld [vmem:[#allocation6 + $0x10] sm:$0xf]
    %v138 = vld [vmem:[#allocation6 + $0x14] sm:$0xf]
    %v139 = vld [vmem:[#allocation6 + $0x18] sm:$0xf]
    %v140 = vld [vmem:[#allocation6 + $0x1c] sm:$0xf]
    %v141 = vld [vmem:[#allocation6 + $0x20] sm:$0xf]
    %v142 = vld [vmem:[#allocation6 + $0x24] sm:$0xf]
    %v143 = vld [vmem:[#allocation6 + $0x28] sm:$0xf]
    %v144 = vld [vmem:[#allocation6 + $0x2c] sm:$0xf]
    %v145 = vld [vmem:[#allocation6 + $0x30] sm:$0xf]
    %v146 = vld [vmem:[#allocation6 + $0x34] sm:$0xf]
    %v147 = vld [vmem:[#allocation6 + $0x38] sm:$0xf]
    %v148 = vld [vmem:[#allocation6 + $0x3c] sm:$0xf]
    %v149 = vld [vmem:[%s4] sm:$0x1]
    %v151 = vlaneseq
    %v152 = vshrl.u32 %v151, 7
    %v153 = vsub.s32 0, %v152
    %v154 = vrot.slane %v149, %v153
    %v172 = vunpack.c.l.b16 %v133
    %v173 = vunpack.c.l.b16 %v134
    %v174 = vunpack.c.l.b16 %v135
    %v175 = vunpack.c.l.b16 %v136
    %v176 = vunpack.c.l.b16 %v137
    %v177 = vunpack.c.l.b16 %v138
    %v178 = vunpack.c.l.b16 %v139
    %v179 = vunpack.c.l.b16 %v140
    %v180 = vunpack.c.l.b16 %v141
    %v181 = vunpack.c.l.b16 %v142
    %v182 = vunpack.c.l.b16 %v143
    %v183 = vunpack.c.l.b16 %v144
    %v184 = vunpack.c.l.b16 %v145
    %v185 = vunpack.c.l.b16 %v146
    %v186 = vunpack.c.l.b16 %v147
    %v187 = vunpack.c.l.b16 %v148
    %v188 = vpack.c.b16 %v173, %v172
    %v189 = vpack.c.b16 %v175, %v174
    %v190 = vpack.c.b16 %v177, %v176
    %v191 = vpack.c.b16 %v179, %v178
    %v192 = vpack.c.b16 %v181, %v180
    %v193 = vpack.c.b16 %v183, %v182
    %v194 = vpack.c.b16 %v185, %v184
    %v195 = vpack.c.b16 %v187, %v186
    %204 = vmatprep.subr.bf16.mxu0 0
    %205 = vmatpush1.bf16.msra.mxu0 %v195
    %206 = vmatprep.subr.bf16.mxu0 0
    %207 = vmatpush1.bf16.msra.mxu0 %v194
    %208 = vmatprep.subr.bf16.mxu0 0
    %209 = vmatpush1.bf16.msra.mxu0 %v193
    %210 = vmatprep.subr.bf16.mxu0 0
    %211 = vmatpush1.bf16.msra.mxu0 %v192
    %212 = vmatprep.subr.bf16.mxu0 0
    %213 = vmatpush1.bf16.msra.mxu0 %v191
    %214 = vmatprep.subr.bf16.mxu0 0
    %215 = vmatpush1.bf16.msra.mxu0 %v190
    %216 = vmatprep.subr.bf16.mxu0 0
    %217 = vmatpush1.bf16.msra.mxu0 %v189
    %218 = vmatprep.subr.bf16.mxu0 0
    %219 = vmatpush1.bf16.msra.mxu0 %v188
    %220 = vmatprep.subr.bf16.mxu0 0
    %221 = vmatpush2.bf16.msra.mxu0 0
    %222 = vmatprep.subr.bf16.mxu0 0
    %223 = vmatpush2.bf16.msra.mxu0 0
    %224 = vmatprep.subr.bf16.mxu0 0
    %225 = vmatpush2.bf16.msra.mxu0 0
    %226 = vmatprep.subr.bf16.mxu0 0
    %227 = vmatpush2.bf16.msra.mxu0 0
    %228 = vmatprep.subr.bf16.mxu0 0
    %229 = vmatpush2.bf16.msra.mxu0 0
    %230 = vmatprep.subr.bf16.mxu0 0
    %231 = vmatpush2.bf16.msra.mxu0 0
    %232 = vmatprep.subr.bf16.mxu0 0
    %233 = vmatpush2.bf16.msra.mxu0 0
    %234 = vmatprep.subr.bf16.mxu0 0
    %235 = vmatpush2.bf16.msra.mxu0 0
    %236 = vmatprep.mubr.bf16.mxu0 0
    %237 = vmatmul.mubr.bf16.gmra.mxu0 %v132
    %v238 = vpop.f32.mrf.mxu0
    %v239 = vadd.f32 %v154, %v238
    %v240 = vpop.f32.mrf.mxu0
    %v241 = vpop.f32.mrf.mxu0
    %v242 = vpop.f32.mrf.mxu0
    %243 = vdwg.mxu0
    %244 = vst [vmem:[%s5] sm:$0xff] %v239
    // Predicated region
    $region34: #{fwd.1} parent=1 // pred_check
      _
    $region35: #{fwd.1} parent=1 // pred_check_branch
      %246 = sbr.rel (0) target = $region37
    $region36: #{fwd.1} parent=1 // pred_region
      _
    $region37: #{fwd.1} parent=1 // pred_fallthru
      _
    // Predicated region
    $region38: #{fwd.1} parent=1 // pred_check
      _
    $region39: #{fwd.1} parent=1 // pred_check_branch
      %248 = sbr.rel (0) target = $region41
    $region40: #{fwd.1} parent=1 // pred_region
      _
    $region41: #{fwd.1} parent=1 // pred_fallthru
      _
    %249 = vsyncpa [#allocation3], 1
    %250 = vsyncpa [#allocation5], 1

</llo_original>
